<compile_context>
chip_gen: v5e
topology: v5e:2x2
jax: 0.10.0
libtpu: 0.0.40
codegen_flags: <defaults>
</compile_context>

<pallas_src>
import functools

import jax
import jax.numpy as jnp
from jax.experimental import pallas as pl
from jax.experimental.pallas import tpu as pltpu


def _round_up(x, m):
    return ((x + m - 1) // m) * m


def _cdiv(a, b):
    return -(-a // b)


def _vmem_capacity_bytes():
    """Best-effort trace-time VMEM query; conservative fallback (v7x per-TC)."""
    try:
        info = pltpu.get_tpu_info()
        cap = getattr(info, "vmem_capacity_bytes", None)
        if cap:
            return int(cap)
    except Exception:
        pass
    return 64 * 1024 * 1024


def _choose_tile(extent, target, align):
    """Tile = multiple of `align`, close to `target`, dividing the padded
    extent as tightly as possible (avoids edge-tile padding blow-up)."""
    padded = _round_up(max(int(extent), 1), align)
    target = max(align, min(_round_up(int(target), align), padded))
    n_blocks = _cdiv(padded, target)
    tile = _round_up(_cdiv(padded, n_blocks), align)
    padded = tile * n_blocks
    return tile, padded, n_blocks


# ---------------------------------------------------------------------------
# Kernels
# ---------------------------------------------------------------------------
def _kernel_f32_out(x_ref, w_ref, b_ref, o_ref, *, activation):
    """f32 output: accumulate directly into the resident output block."""
    k = pl.program_id(2)
    nk = pl.num_programs(2)
    prod = jnp.dot(x_ref[...], w_ref[...], preferred_element_type=jnp.float32)

    @pl.when(k == 0)
    def _():
        o_ref[...] = prod                      # assign-on-first, no zero store

    @pl.when(k > 0)
    def _():
        o_ref[...] += prod

    @pl.when(k == nk - 1)
    def _():
        o_ref[...] = activation(o_ref[...] + b_ref[...].astype(jnp.float32))


def _kernel_acc(x_ref, w_ref, b_ref, o_ref, acc_ref, *, activation):
    """Low-precision output: f32 VMEM accumulator, cast only in the epilogue."""
    k = pl.program_id(2)
    nk = pl.num_programs(2)
    prod = jnp.dot(x_ref[...], w_ref[...], preferred_element_type=jnp.float32)

    @pl.when(k == 0)
    def _():
        acc_ref[...] = prod

    @pl.when(k > 0)
    def _():
        acc_ref[...] += prod

    @pl.when(k == nk - 1)
    def _():
        y = activation(acc_ref[...] + b_ref[...].astype(jnp.float32))
        o_ref[...] = y.astype(o_ref.dtype)


# ---------------------------------------------------------------------------
# Host-side wrappers
# ---------------------------------------------------------------------------
def prepare_params(weight, bias, *, param_dtype=None):
    """One-time prep (hoisted out of the forward path):
       PyTorch layout [H, K] -> MXU-friendly [K, H], padded to 128-multiples.
       Bias is kept f32 (it is added in the f32 epilogue) and lane-padded.
       Optionally cast the weight (e.g. bf16 on v6e/v7x; cast x too then)."""
    w_t = jnp.asarray(weight).T                       # [K, H]
    if param_dtype is not None:
        w_t = w_t.astype(param_dtype)
    b = jnp.asarray(bias).astype(jnp.float32)
    K, H = w_t.shape
    k_pad = _round_up(K, 128)
    h_pad = _round_up(H, 128)
    if (k_pad, h_pad) != (K, H):
        w_t = jnp.pad(w_t, ((0, k_pad - K), (0, h_pad - H)))
    if h_pad != H:
        b = jnp.pad(b, (0, h_pad - H))
    return w_t, b.reshape(1, h_pad)


def nonlinear_forward(x, w_t, bias_row, activation=None, *, out_features=None,
                      tm=None, tn=None, tk=None):
    """x: [M, K]; w_t: [Kp, Hp] pre-transposed (and possibly pre-padded)
    weight; bias_row: [1, Hp]; out_features: original H (for final slice)."""
    has_act = activation is not None
    act = activation if has_act else (lambda v: v)

    M, K = x.shape
    Kw, Hw = w_t.shape
    assert Kw >= K, "weight/input feature mismatch"
    if bias_row.ndim == 1:
        bias_row = bias_row.reshape(1, -1)
    assert bias_row.shape[1] == Hw, "bias/weight mismatch"
    H = Hw if out_features is None else out_features

    x_itemsize = jnp.dtype(x.dtype).itemsize
    w_itemsize = jnp.dtype(w_t.dtype).itemsize
    out_dtype = x.dtype
    out_itemsize = jnp.dtype(out_dtype).itemsize
    m_align = max(8, 32 // x_itemsize)          # 8 f32, 16 bf16, 32 int8/fp8

    # Generation-aware tile targets and VMEM budget.
    vmem_cap = _vmem_capacity_bytes()
    if vmem_cap >= 96 * 1024 * 1024:            # v5e / v6e (128 MiB VMEM)
        tm_t, tn_t, tk_t = 1024, 1024, 1024
        vmem_limit = 64 * 1024 * 1024
        multi_core = False
    else:                                        # v7x (64 MiB per TensorCore)
        tm_t, tn_t, tk_t = 512, 512, 1024
        vmem_limit = 48 * 1024 * 1024
        multi_core = True                        # 2 TensorCores per chip
    tm_t = tm_t if tm is None else tm
    tn_t = tn_t if tn is None else tn
    tk_t = tk_t if tk is None else tk

    tm, m_pad, n_m = _choose_tile(M, tm_t, m_align)
    tn, h_pad, n_h = _choose_tile(Hw, tn_t, 128)
    tk, k_pad, n_k = _choose_tile(Kw, tk_t, 128)

    # Keep >=2 blocks on a parallel axis so both v7x TensorCores get work.
    if multi_core and n_m == 1 and n_h == 1:
        if m_pad >= 2 * m_align:
            tm, m_pad, n_m = _choose_tile(M, _cdiv(m_pad, 2), m_align)
        elif h_pad >= 2 * 128:
            tn, h_pad, n_h = _choose_tile(Hw, _cdiv(h_pad, 2), 128)

    # Guarded padding: no-ops when params were pre-padded by prepare_params
    # and x is already tile-aligned.  Zero padding is exact for the matmul.
    xp = x if (m_pad == M and k_pad == K) else jnp.pad(
        x, ((0, m_pad - M), (0, k_pad - K)))
    wp = w_t if (k_pad == Kw and h_pad == Hw) else jnp.pad(
        w_t, ((0, k_pad - Kw), (0, h_pad - Hw)))
    bp = bias_row if h_pad == Hw else jnp.pad(
        bias_row, ((0, 0), (0, h_pad - Hw)))

    # VMEM footprint (double-buffered inputs/output + optional acc scratch).
    f32_out = out_dtype == jnp.float32
    footprint = (2 * tm * tk * x_itemsize + 2 * tk * tn * w_itemsize
                 + 2 * tn * 4 + 2 * tm * tn * out_itemsize
                 + (0 if f32_out else tm * tn * 4))
    vmem_limit = max(vmem_limit, footprint + (8 << 20))
    vmem_limit = min(vmem_limit, int(vmem_cap) - (16 << 20))

    # Cost estimate reflecting actual HBM traffic including re-reads.
    cost = pl.CostEstimate(
        flops=2 * m_pad * k_pad * h_pad,
        transcendentals=(m_pad * h_pad if has_act else 0),
        bytes_accessed=(m_pad * k_pad * x_itemsize * n_h
                        + k_pad * h_pad * w_itemsize * n_m
                        + h_pad * 4 * n_m
                        + m_pad * h_pad * out_itemsize),
    )

    if f32_out:
        kernel = functools.partial(_kernel_f32_out, activation=act)
        scratch = []
    else:
        kernel = functools.partial(_kernel_acc, activation=act)
        scratch = [pltpu.VMEM((tm, tn), jnp.float32)]

    out = pl.pallas_call(
        kernel,
        out_shape=jax.ShapeDtypeStruct((m_pad, h_pad), out_dtype),
        grid_spec=pltpu.PrefetchScalarGridSpec(
            num_scalar_prefetch=0,
            grid=(n_m, n_h, n_k),
            in_specs=[
                pl.BlockSpec((tm, tk), lambda i, j, k: (i, k)),
                pl.BlockSpec((tk, tn), lambda i, j, k: (k, j)),
                pl.BlockSpec((1, tn), lambda i, j, k: (0, j)),
            ],
            out_specs=pl.BlockSpec((tm, tn), lambda i, j, k: (i, j)),
            scratch_shapes=scratch,
        ),
        compiler_params=pltpu.CompilerParams(
            dimension_semantics=("parallel", "parallel", "arbitrary"),
            vmem_limit_bytes=int(vmem_limit),
        ),
        cost_estimate=cost,
    )(xp, wp, bp)

    if m_pad != M or h_pad != H:
        out = out[:M, :H]
    return out


def init_nonlinear_params(key, input_size, hidden_size):
    """Deterministic re-implementation of NonLinear.reset_parameters()."""
    k_w, k_b = jax.random.split(key)
    # nn.init.orthogonal: QR of a gaussian matrix, sign-corrected.
    a = jax.random.normal(k_w, (hidden_size, input_size), jnp.float32)
    flat = a if hidden_size >= input_size else a.T
    q, r = jnp.linalg.qr(flat)
    q = q * jnp.sign(jnp.diag(r))[None, :]
    weight = q if hidden_size >= input_size else q.T      # [hidden, input]
    weight = weight[:hidden_size, :input_size]
    # nn.init.normal(bias, 0.0, 0.01)
    bias = 0.01 * jax.random.normal(k_b, (hidden_size,), jnp.float32)
    return weight, bias


if __name__ == "__main__":
    key = jax.random.PRNGKey(0)
    batch, seq, input_size, hidden_size = 2, 8, 32, 32

    k_x, k_p = jax.random.split(key)
    x = jax.random.normal(k_x, (batch, seq, input_size), jnp.float32)
    weight, bias = init_nonlinear_params(k_p, input_size, hidden_size)

    # One-time param prep (transpose + lane padding hoisted out of forward).
    w_t, b_row = prepare_params(weight, bias)
    x2d = x.reshape(batch * seq, input_size)   # Linear acts on the last axis

    ref_id = x2d @ weight.T + bias

    # 1) Module default: activation=None -> identity.
    out_id = nonlinear_forward(x2d, w_t, b_row, activation=None,
                               out_features=hidden_size)
    out = out_id.reshape(batch, seq, hidden_size)
    jax.block_until_ready(out)
    assert jnp.allclose(out_id, ref_id, atol=1e-5, rtol=1e-5)

    # 2) Non-linear variant with a fused in-kernel epilogue (tanh on the EUP).
    out_tanh = nonlinear_forward(x2d, w_t, b_row, activation=jnp.tanh,
                                 out_features=hidden_size)
    jax.block_until_ready(out_tanh)
    ref_tanh = jnp.tanh(ref_id)
    assert jnp.allclose(out_tanh, ref_tanh, atol=1e-5, rtol=1e-5)

    print("KERNEL_OK")
</pallas_src>

<mosaic_0001>
module attributes {stable_mosaic.version = 11 : i64} {
  func.func @_kernel_f32_out(%arg0: i32, %arg1: i32, %arg2: i32, %arg3: memref<8x128xf32, #tpu.memory_space<vmem>>, %arg4: memref<128x128xf32, #tpu.memory_space<vmem>>, %arg5: memref<1x128xf32, #tpu.memory_space<vmem>>, %arg6: memref<8x128xf32, #tpu.memory_space<vmem>>) attributes {dimension_semantics = [#tpu.dimension_semantics<parallel>, #tpu.dimension_semantics<parallel>, #tpu.dimension_semantics<arbitrary>], iteration_bounds = array<i64: 2, 1, 1>, scalar_prefetch = 0 : i64, scratch_operands = 0 : i64, tpu.core_type = #tpu.core_type<tc>, window_params = [{transform_indices = @transform_0, window_bounds = array<i64: 8, 128>}, {transform_indices = @transform_1, window_bounds = array<i64: 128, 128>}, {transform_indices = @transform_2, window_bounds = array<i64: 1, 128>}, {transform_indices = @transform_3, window_bounds = array<i64: 8, 128>}]} {
    %c0 = arith.constant 0 : index
    %c0_0 = arith.constant 0 : index
    %0 = vector.load %arg3[%c0, %c0_0] : memref<8x128xf32, #tpu.memory_space<vmem>>, vector<8x128xf32>
    %c0_1 = arith.constant 0 : index
    %c0_2 = arith.constant 0 : index
    %1 = vector.load %arg4[%c0_1, %c0_2] : memref<128x128xf32, #tpu.memory_space<vmem>>, vector<128x128xf32>
    %cst = arith.constant dense<0.000000e+00> : vector<8x128xf32>
    %2 = tpu.matmul %0, %1, %cst {dimension_numbers = #tpu.dot_dimension_numbers<[1], [0], [0], [1], [0, 0, 1, 1], [], []>} : vector<8x128xf32>, vector<128x128xf32>, vector<8x128xf32> -> vector<8x128xf32>
    %c0_i32 = arith.constant 0 : i32
    %3 = arith.cmpi eq, %arg2, %c0_i32 : i32
    %4 = arith.extui %3 : i1 to i32
    %c0_i32_3 = arith.constant 0 : i32
    %5 = arith.cmpi ne, %4, %c0_i32_3 : i32
    scf.if %5 {
      %c0_8 = arith.constant 0 : index
      %c0_9 = arith.constant 0 : index
      %12 = vector.load %arg6[%c0_8, %c0_9] : memref<8x128xf32, #tpu.memory_space<vmem>>, vector<8x128xf32>
      tpu.vector_store %arg6[%c0_8, %c0_9], %2 {strides = array<i32>} : memref<8x128xf32, #tpu.memory_space<vmem>>, vector<8x128xf32>,
    } else {
    }
    %c0_i32_4 = arith.constant 0 : i32
    %6 = arith.cmpi sgt, %arg2, %c0_i32_4 : i32
    %7 = arith.extui %6 : i1 to i32
    %c0_i32_5 = arith.constant 0 : i32
    %8 = arith.cmpi ne, %7, %c0_i32_5 : i32
    scf.if %8 {
      %c0_8 = arith.constant 0 : index
      %c0_9 = arith.constant 0 : index
      %12 = vector.load %arg6[%c0_8, %c0_9] : memref<8x128xf32, #tpu.memory_space<vmem>>, vector<8x128xf32>
      %13 = arith.addf %12, %2 : vector<8x128xf32>
      %c0_10 = arith.constant 0 : index
      %c0_11 = arith.constant 0 : index
      %14 = vector.load %arg6[%c0_10, %c0_11] : memref<8x128xf32, #tpu.memory_space<vmem>>, vector<8x128xf32>
      tpu.vector_store %arg6[%c0_10, %c0_11], %13 {strides = array<i32>} : memref<8x128xf32, #tpu.memory_space<vmem>>, vector<8x128xf32>,
    } else {
    }
    %c0_i32_6 = arith.constant 0 : i32
    %9 = arith.cmpi eq, %arg2, %c0_i32_6 : i32
    %10 = arith.extui %9 : i1 to i32
    %c0_i32_7 = arith.constant 0 : i32
    %11 = arith.cmpi ne, %10, %c0_i32_7 : i32
    scf.if %11 {
      %c0_8 = arith.constant 0 : index
      %c0_9 = arith.constant 0 : index
      %12 = vector.load %arg6[%c0_8, %c0_9] : memref<8x128xf32, #tpu.memory_space<vmem>>, vector<8x128xf32>
      %c0_10 = arith.constant 0 : index
      %c0_11 = arith.constant 0 : index
      %13 = vector.load %arg5[%c0_10, %c0_11] : memref<1x128xf32, #tpu.memory_space<vmem>>, vector<1x128xf32>
      %14 = vector.broadcast %13 : vector<1x128xf32> to vector<8x128xf32>
      %15 = arith.addf %12, %14 : vector<8x128xf32>
      %c0_12 = arith.constant 0 : index
      %c0_13 = arith.constant 0 : index
      %16 = vector.load %arg6[%c0_12, %c0_13] : memref<8x128xf32, #tpu.memory_space<vmem>>, vector<8x128xf32>
      tpu.vector_store %arg6[%c0_12, %c0_13], %15 {strides = array<i32>} : memref<8x128xf32, #tpu.memory_space<vmem>>, vector<8x128xf32>,
    } else {
    }
    return
  }
  func.func @transform_0(%arg0: i32, %arg1: i32, %arg2: i32) -> (i32, i32) {
    %c0_i32 = arith.constant 0 : i32
    return %arg0, %arg2 : i32, i32
  }
  func.func @transform_1(%arg0: i32, %arg1: i32, %arg2: i32) -> (i32, i32) {
    %c0_i32 = arith.constant 0 : i32
    return %arg2, %arg1 : i32, i32
  }
  func.func @transform_2(%arg0: i32, %arg1: i32, %arg2: i32) -> (i32, i32) {
    %c0_i32 = arith.constant 0 : i32
    %c0_i32_0 = arith.constant 0 : i32
    return %c0_i32, %arg1 : i32, i32
  }
  func.func @transform_3(%arg0: i32, %arg1: i32, %arg2: i32) -> (i32, i32) {
    %c0_i32 = arith.constant 0 : i32
    return %arg0, %arg1 : i32, i32
  }
}

</mosaic_0001>

<llo_original>
// kernel: tpu_custom_call.1
$region0: #{tpu_custom_call.1}
  #allocation0 [shape = 'u32[]', space=smem, size = 0x4, offset = 0x4, fixed_abs, tag = 'smem constant byte address 0x4 - core index']
  #allocation1 [shape = 'u32[72,128]{1,0:T(1,128)}', space=vmem, size = 0x9000, scoped, tag = 'internal scratch']
  %s0 = inlined_call_operand.hbm [shape: f32[16,128], index: 0, kind: input, shape index: {}]
  %s1 = inlined_call_operand.hbm [shape: f32[128,128], index: 1, kind: input, shape index: {}]
  %s2 = inlined_call_operand.vmem [shape: f32[1,128], index: 2, kind: input, shape index: {}]
  %s3 = inlined_call_operand.hbm [shape: f32[16,128], index: 3, kind: output, shape index: {}]
  %s4 = sld [smem:[#allocation0]]
  $region65: #{tpu_custom_call.1} parent=0
    _
  %s6 = ssub.s32 1, %s4
  %s7 = scalar_select 0, %s6, %s4
  $region1: #{tpu_custom_call.1} parent=0
    #allocation2 [shape = 'u8[8192]{0}', space=vmem, size = 0x2000, scoped, tag = 'input window, operand 0']
    #allocation3 [shape = 's32[2]{0}', space=sflag, size = 0x8, scoped, tag = 'scoped memory for tpu_custom_call.1']
    #allocation4 [shape = 's32[2]{0}', space=sflag, size = 0x8, scoped, tag = 'scoped memory for tpu_custom_call.1']
    #allocation5 [shape = 'u8[65536]{0}', space=vmem, size = 0x10000, scoped, tag = 'input window, operand 1, single buffered']
    #allocation6 [shape = 's32[1]{0}', space=sflag, size = 0x4, scoped, tag = 'scoped memory for tpu_custom_call.1']
    #allocation7 [shape = 'u8[8192]{0}', space=vmem, size = 0x2000, scoped, tag = 'output window, operand 0']
    %8 = vsyncpa [#allocation3], 0
    %s9 = scalar_lea.sflag [#allocation3], 1
    %10 = vsyncpa %s9, 0
    %11 = vsyncpa [#allocation6], 0
    %12 = vsyncpa [#allocation4], 0
    %s13 = scalar_lea.sflag [#allocation4], 1
    %14 = vsyncpa %s13, 0
    loop: start=0, step=1, limit=4
    $region2: #{tpu_custom_call.1} parent=1 // loop_pre_header
      _
    $region3: #{tpu_custom_call.1} parent=1 // loop_header
      %s16 = sphi 0, %s20
      %p17 = scmp.ge.s32.totalorder %s16, 4
      %s23 = sphi 0, %s42
      %s24 = sphi 0, %s38
      %s25 = sphi 0, %s34
      %s26 = sphi 0, %s23
      %s27 = sphi 0, %s24
      %s28 = sphi 0, %s25
      %s29 = sphi 0, %s26
      %s30 = sphi 0, %s27
      %s31 = sphi 0, %s28
      %s47 = sphi 0, %s49
      %s50 = sphi 0, %s47
      %s51 = sphi 0, %s50
      %s67 = sphi 0, %s51
      %s75 = sphi 0, %s77
      %s78 = sphi 0, %s75
      %s79 = sphi 0, %s78
      %s95 = sphi 0, %s79
      %s101 = sphi 0, %s103
      %s104 = sphi 0, %s101
      %s105 = sphi 0, %s104
      %s121 = sphi 0, %s105
      %s129 = sphi 0, %s131
      %s132 = sphi 0, %s129
      %s133 = sphi 0, %s132
      %s149 = sphi 0, %s133
    $region4: #{tpu_custom_call.1} parent=1 // loop_header_branch
      %19 = sbr.rel (%p17) target = $region8
    $region5: #{tpu_custom_call.1} parent=1 // loop_body
      %s21 = ssub.s32 %s16, 1
      %s22 = ssub.s32 %s16, 2
      %s32 = sadd.s32 1, %s25
      %p33 = scmp.ge.s32.totalorder %s32, 1
      %s34 = scalar_select %p33, 0, %s32
      %s35 = sadd.s32 1, %s24
      %s36 = scalar_select %p33, %s35, %s24
      %p37 = scmp.ge.s32.totalorder %s36, 1
      %s38 = scalar_select %p37, 0, %s36
      %s39 = sadd.s32 1, %s23
      %s40 = scalar_select %p37, %s39, %s23
      %p41 = scmp.ge.s32.totalorder %s40, 2
      %s42 = scalar_select %p41, 0, %s40
      %s43 = ssub.s32 %s23, %s42
      %s44 = ssub.s32 %s25, %s34
      %s45 = sor.u32 %s43, %s44
      %p46 = scmp.eq.s32.totalorder %s45, 0
      %s48 = sadd.s32 %s47, 1
      %s49 = scalar_select %p46, %s47, %s48
      %p52 = pneg %p46
      %p53 = scmp.eq.s32.totalorder %s16, 1
      %p54 = por %p52, %p53
      %p55 = scmp.ne.s32.totalorder %s47, %s50
      %p56 = scmp.eq.s32.totalorder %s16, 0
      %p57 = por %p55, %p56
      %p58 = scmp.ne.s32.totalorder %s47, %s50
      %p59 = scmp.eq.s32.totalorder %s21, 1
      %p60 = por %p58, %p59
      %p61 = scmp.ne.s32.totalorder %s50, %s51
      %p62 = scmp.eq.s32.totalorder %s21, 0
      %p63 = por %p61, %p62
      %p64 = scmp.ne.s32.totalorder %s50, %s51
      %p65 = scmp.eq.s32.totalorder %s22, 1
      %p66 = por %p64, %p65
      %p68 = scmp.ne.s32.totalorder %s51, %s67
      %p69 = scmp.eq.s32.totalorder %s22, 0
      %p70 = por %p68, %p69
      %s71 = ssub.s32 %s25, %s34
      %s72 = ssub.s32 %s24, %s38
      %s73 = sor.u32 %s71, %s72
      %p74 = scmp.eq.s32.totalorder %s73, 0
      %s76 = sadd.s32 %s75, 1
      %s77 = scalar_select %p74, %s75, %s76
      %p80 = pneg %p74
      %p81 = scmp.eq.s32.totalorder %s16, 1
      %p82 = por %p80, %p81
      %p83 = scmp.ne.s32.totalorder %s75, %s78
      %p84 = scmp.eq.s32.totalorder %s16, 0
      %p85 = por %p83, %p84
      %p86 = scmp.ne.s32.totalorder %s75, %s78
      %p87 = scmp.eq.s32.totalorder %s21, 1
      %p88 = por %p86, %p87
      %p89 = scmp.ne.s32.totalorder %s78, %s79
      %p90 = scmp.eq.s32.totalorder %s21, 0
      %p91 = por %p89, %p90
      %p92 = scmp.ne.s32.totalorder %s78, %s79
      %p93 = scmp.eq.s32.totalorder %s22, 1
      %p94 = por %p92, %p93
      %p96 = scmp.ne.s32.totalorder %s79, %s95
      %p97 = scmp.eq.s32.totalorder %s22, 0
      %p98 = por %p96, %p97
      %s99 = ssub.s32 %s24, %s38
      %p100 = scmp.eq.s32.totalorder %s99, 0
      %s102 = sadd.s32 %s101, 1
      %s103 = scalar_select %p100, %s101, %s102
      %p106 = pneg %p100
      %p107 = scmp.eq.s32.totalorder %s16, 1
      %p108 = por %p106, %p107
      %p109 = scmp.ne.s32.totalorder %s101, %s104
      %p110 = scmp.eq.s32.totalorder %s16, 0
      %p111 = por %p109, %p110
      %p112 = scmp.ne.s32.totalorder %s101, %s104
      %p113 = scmp.eq.s32.totalorder %s21, 1
      %p114 = por %p112, %p113
      %p115 = scmp.ne.s32.totalorder %s104, %s105
      %p116 = scmp.eq.s32.totalorder %s21, 0
      %p117 = por %p115, %p116
      %p118 = scmp.ne.s32.totalorder %s104, %s105
      %p119 = scmp.eq.s32.totalorder %s22, 1
      %p120 = por %p118, %p119
      %p122 = scmp.ne.s32.totalorder %s105, %s121
      %p123 = scmp.eq.s32.totalorder %s22, 0
      %p124 = por %p122, %p123
      %s125 = ssub.s32 %s23, %s42
      %s126 = ssub.s32 %s24, %s38
      %s127 = sor.u32 %s125, %s126
      %p128 = scmp.eq.s32.totalorder %s127, 0
      %s130 = sadd.s32 %s129, 1
      %s131 = scalar_select %p128, %s129, %s130
      %p134 = pneg %p128
      %p135 = scmp.eq.s32.totalorder %s16, 1
      %p136 = por %p134, %p135
      %p137 = scmp.ne.s32.totalorder %s129, %s132
      %p138 = scmp.eq.s32.totalorder %s16, 0
      %p139 = por %p137, %p138
      %p140 = scmp.ne.s32.totalorder %s129, %s132
      %p141 = scmp.eq.s32.totalorder %s21, 1
      %p142 = por %p140, %p141
      %p143 = scmp.ne.s32.totalorder %s132, %s133
      %p144 = scmp.eq.s32.totalorder %s21, 0
      %p145 = por %p143, %p144
      %p146 = scmp.ne.s32.totalorder %s132, %s133
      %p147 = scmp.eq.s32.totalorder %s22, 1
      %p148 = por %p146, %p147
      %p150 = scmp.ne.s32.totalorder %s133, %s149
      %p151 = scmp.eq.s32.totalorder %s22, 0
      %p152 = por %p150, %p151
      %p153 = scmp.le.s32.totalorder 1, %s16
      %p154 = scmp.lt.s32.totalorder %s16, 3
      %p155 = pnand %p153, %p154
      %p156 = pneg %p155
      // Predicated region
      $region9: #{tpu_custom_call.1} parent=5 // pred_check
        _
      $region10: #{tpu_custom_call.1} parent=5 // pred_check_branch
        %158 = sbr.rel (%p155) target = $region12
      $region11: #{tpu_custom_call.1} parent=5 // pred_region
        %s159 = ssub.s32 %s16, 1
        // Predicated region
        $region13: #{tpu_custom_call.1} parent=11 // pred_check
          %p160 = pneg %p91
        $region14: #{tpu_custom_call.1} parent=11 // pred_check_branch
          %162 = sbr.rel (%p160) target = $region16
        $region15: #{tpu_custom_call.1} parent=11 // pred_region
          %s163 = smul.u32 16, %s28
          %165 = vsyncadd [#allocation6], 0
          %s166 = sadd.s32 %s27, %s163
          %s167 = smul.addr %s166, 8
          %s168 = scalar_lea.hbm %s1, %s167
          %s169 = sshll.u32 %s168, 4
          %s170 = int_to_ptr.hbm [resolvable:$true] %s169
          %s171 = sshll.u32 [#allocation5], 4
          %s172 = int_to_ptr.vmem [resolvable:$true] %s171
          %177 = dma.hbm_to_vmem [thread:$0]  %s170, 2048, %s172, [#allocation6], 128, 128, 8
        $region16: #{tpu_custom_call.1} parent=11 // pred_fallthru
          _
        // Predicated region
        $region17: #{tpu_custom_call.1} parent=11 // pred_check
          %p178 = pneg %p117
        $region18: #{tpu_custom_call.1} parent=11 // pred_check_branch
          %180 = sbr.rel (%p178) target = $region20
        $region19: #{tpu_custom_call.1} parent=11 // pred_region
          %p181 = scmp.lt.s32.totalorder %s27, 0
          %s182 = scalar_select %p181, %s27, 0
          %s183 = scalar_lea.vmem %s2, %s182
        $region20: #{tpu_custom_call.1} parent=11 // pred_fallthru
          _
      $region12: #{tpu_custom_call.1} parent=5 // pred_fallthru
        _
      %p184 = scmp.lt.s32.totalorder %s16, 2
      // Predicated region
      $region21: #{tpu_custom_call.1} parent=5 // pred_check
        %p185 = pneg %p184
      $region22: #{tpu_custom_call.1} parent=5 // pred_check_branch
        %187 = sbr.rel (%p185) target = $region24
      $region23: #{tpu_custom_call.1} parent=5 // pred_region
        // Predicated region
        $region25: #{tpu_custom_call.1} parent=23 // pred_check
          %p188 = pneg %p57
        $region26: #{tpu_custom_call.1} parent=23 // pred_check_branch
          %190 = sbr.rel (%p188) target = $region28
        $region27: #{tpu_custom_call.1} parent=23 // pred_region
          %s191 = sand.u32 %s47, 1
          %s192 = scalar_lea.sflag [#allocation3], %s191
          %s193 = sand.u32 %s47, 1
          %s194 = smul.addr %s193, 8
          %s195 = scalar_lea.vmem [#allocation2], %s194
          %197 = vsyncadd %s192, 0
          %s198 = sadd.s32 %s25, %s23
          %s199 = smul.addr %s198, 8
          %s200 = scalar_lea.hbm %s0, %s199
          %s202 = sshll.u32 %s200, 4
          %s203 = int_to_ptr.hbm [resolvable:$true] %s202
          %s204 = sshll.u32 %s195, 4
          %s205 = int_to_ptr.vmem [resolvable:$true] %s204
          %207 = dma.hbm_to_vmem [thread:$0]  %s203, 128, %s205, %s192
        $region28: #{tpu_custom_call.1} parent=23 // pred_fallthru
          _
      $region24: #{tpu_custom_call.1} parent=5 // pred_fallthru
        _
      %p208 = scmp.le.s32.totalorder 1, %s16
      %p209 = scmp.lt.s32.totalorder %s16, 3
      %p210 = pnand %p208, %p209
      %p211 = pneg %p210
      // Predicated region
      $region29: #{tpu_custom_call.1} parent=5 // pred_check
        _
      $region30: #{tpu_custom_call.1} parent=5 // pred_check_branch
        %213 = sbr.rel (%p210) target = $region32
      $region31: #{tpu_custom_call.1} parent=5 // pred_region
        %s214 = ssub.s32 %s16, 1
        %s215 = sand.u32 %s50, 1
        %s216 = scalar_lea.sflag [#allocation3], %s215
        %s217 = sand.u32 %s50, 1
        %s218 = smul.addr %s217, 8
        %s219 = scalar_lea.vmem [#allocation2], %s218
        // Predicated region
        $region33: #{tpu_custom_call.1} parent=31 // pred_check
          %p220 = pneg %p63
        $region34: #{tpu_custom_call.1} parent=31 // pred_check_branch
          %222 = sbr.rel (%p220) target = $region36
        $region35: #{tpu_custom_call.1} parent=31 // pred_region
          %224 = dma.done %s216, 128
        $region36: #{tpu_custom_call.1} parent=31 // pred_fallthru
          _
        // Predicated region
        $region37: #{tpu_custom_call.1} parent=31 // pred_check
          %p225 = pneg %p91
        $region38: #{tpu_custom_call.1} parent=31 // pred_check_branch
          %227 = sbr.rel (%p225) target = $region40
        $region39: #{tpu_custom_call.1} parent=31 // pred_region
          %229 = dma.done [#allocation6], 2048
        $region40: #{tpu_custom_call.1} parent=31 // pred_fallthru
          _
        %s230 = sand.u32 %s50, 1
        %s231 = scalar_lea.sflag [#allocation3], %s230
        %s232 = sand.u32 %s50, 1
        %s233 = smul.addr %s232, 8
        %s234 = scalar_lea.vmem [#allocation2], %s233
        %p235 = pneg %p63
        %p236 = pneg %p60
        %p237 = pneg %p91
        %p238 = pneg %p88
        %p239 = scmp.lt.s32.totalorder %s27, 0
        %s240 = scalar_select %p239, %s27, 0
        %s241 = scalar_lea.vmem %s2, %s240
        %p242 = pneg %p117
        %p243 = pneg %p114
        %p244 = pneg %p145
        %p245 = pneg %p142
        %s246 = sand.u32 %s132, 1
        %s247 = scalar_lea.sflag [#allocation4], %s246
        %s248 = sand.u32 %s132, 1
        %s249 = smul.addr %s248, 8
        %s250 = scalar_lea.vmem [#allocation7], %s249
        %s251 = smul.u32 16, %s28
        %p252 = scmp.lt.s32.totalorder %s27, 0
        %s253 = scalar_select %p252, %s27, 0
        %s254 = scalar_lea.vmem %s2, %s253
        %v255 = vld [vmem:[%s219] sm:$0xff]
        %v256 = vld [vmem:[#allocation5] sm:$0xff]
        %v257 = vld [vmem:[#allocation5 + $0x8] sm:$0xff]
        %v258 = vld [vmem:[#allocation5 + $0x10] sm:$0xff]
        %v259 = vld [vmem:[#allocation5 + $0x18] sm:$0xff]
        %v260 = vld [vmem:[#allocation5 + $0x20] sm:$0xff]
        %v261 = vld [vmem:[#allocation5 + $0x28] sm:$0xff]
        %v262 = vld [vmem:[#allocation5 + $0x30] sm:$0xff]
        %v263 = vld [vmem:[#allocation5 + $0x38] sm:$0xff]
        %v264 = vld [vmem:[#allocation5 + $0x40] sm:$0xff]
        %v265 = vld [vmem:[#allocation5 + $0x48] sm:$0xff]
        %v266 = vld [vmem:[#allocation5 + $0x50] sm:$0xff]
        %v267 = vld [vmem:[#allocation5 + $0x58] sm:$0xff]
        %v268 = vld [vmem:[#allocation5 + $0x60] sm:$0xff]
        %v269 = vld [vmem:[#allocation5 + $0x68] sm:$0xff]
        %v270 = vld [vmem:[#allocation5 + $0x70] sm:$0xff]
        %v271 = vld [vmem:[#allocation5 + $0x78] sm:$0xff]
        %272 = vmatpush.msra.mxu0 %v271
        %273 = vmatpush.msra.mxu0 %v270
        %274 = vmatpush.msra.mxu0 %v269
        %275 = vmatpush.msra.mxu0 %v268
        %276 = vmatpush.msra.mxu0 %v267
        %277 = vmatpush.msra.mxu0 %v266
        %278 = vmatpush.msra.mxu0 %v265
        %279 = vmatpush.msra.mxu0 %v264
        %280 = vmatpush.msra.mxu0 %v263
        %281 = vmatpush.msra.mxu0 %v262
        %282 = vmatpush.msra.mxu0 %v261
        %283 = vmatpush.msra.mxu0 %v260
        %284 = vmatpush.msra.mxu0 %v259
        %285 = vmatpush.msra.mxu0 %v258
        %286 = vmatpush.msra.mxu0 %v257
        %287 = vmatpush.msra.mxu0 %v256
        %288 = vmatmul.f32.gmra.mxu0 %v255
        %v289 = vpop.f32.mrf.mxu0
        %v290 = vadd.f32 0.0, %v289
        %291 = vdwg.mxu0
        %p292 = scmp.eq.s32.totalorder %s28, 0
        // Predicated region
        $region41: #{tpu_custom_call.1} parent=31 // pred_check
          %p293 = pneg %p292
        $region42: #{tpu_custom_call.1} parent=31 // pred_check_branch
          %295 = sbr.rel (%p293) target = $region44
        $region43: #{tpu_custom_call.1} parent=31 // pred_region
          %296 = vst [vmem:[%s250] sm:$0xff] %v290
        $region44: #{tpu_custom_call.1} parent=31 // pred_fallthru
          _
        %p297 = scmp.gt.s32.totalorder %s28, 0
        // Predicated region
        $region45: #{tpu_custom_call.1} parent=31 // pred_check
          %p298 = pneg %p297
        $region46: #{tpu_custom_call.1} parent=31 // pred_check_branch
          %300 = sbr.rel (%p298) target = $region48
        $region47: #{tpu_custom_call.1} parent=31 // pred_region
          %v301 = vld [vmem:[%s250] sm:$0xff]
          %v302 = vadd.f32 %v301, %v290
          %303 = vst [vmem:[%s250] sm:$0xff] %v302
        $region48: #{tpu_custom_call.1} parent=31 // pred_fallthru
          _
        // Predicated region
        $region49: #{tpu_custom_call.1} parent=31 // pred_check
          %p304 = pneg %p292
        $region50: #{tpu_custom_call.1} parent=31 // pred_check_branch
          %306 = sbr.rel (%p304) target = $region52
        $region51: #{tpu_custom_call.1} parent=31 // pred_region
          %v307 = vld [vmem:[%s250] sm:$0xff]
          %v308 = vld [vmem:[%s254] sm:$0x1]
          %v310 = vperm.slane %v308, 0
          %v312 = vadd.f32 %v307, %v310
          %313 = vst [vmem:[%s250] sm:$0xff] %v312
        $region52: #{tpu_custom_call.1} parent=31 // pred_fallthru
          _
        %s314 = sand.u32 %s132, 1
        %s315 = scalar_lea.sflag [#allocation4], %s314
        %s316 = sand.u32 %s132, 1
        %s317 = smul.addr %s316, 8
        %s318 = scalar_lea.vmem [#allocation7], %s317
        // Predicated region
        $region53: #{tpu_custom_call.1} parent=31 // pred_check
          %p319 = pneg %p142
        $region54: #{tpu_custom_call.1} parent=31 // pred_check_branch
          %321 = sbr.rel (%p319) target = $region56
        $region55: #{tpu_custom_call.1} parent=31 // pred_region
          %323 = vsyncadd %s315, 0
          %s324 = sadd.s32 %s27, %s26
          %s325 = smul.addr %s324, 8
          %s326 = scalar_lea.hbm %s3, %s325
          %s328 = sshll.u32 %s318, 4
          %s329 = int_to_ptr.vmem [resolvable:$true] %s328
          %s330 = sshll.u32 %s326, 4
          %s331 = int_to_ptr.hbm [resolvable:$true] %s330
          %333 = dma.vmem_to_hbm [thread:$0]  %s329, 128, %s331, %s315
        $region56: #{tpu_custom_call.1} parent=31 // pred_fallthru
          _
      $region32: #{tpu_custom_call.1} parent=5 // pred_fallthru
        _
      %p334 = scmp.le.s32.totalorder 2, %s16
      // Predicated region
      $region57: #{tpu_custom_call.1} parent=5 // pred_check
        %p335 = pneg %p334
      $region58: #{tpu_custom_call.1} parent=5 // pred_check_branch
        %337 = sbr.rel (%p335) target = $region60
      $region59: #{tpu_custom_call.1} parent=5 // pred_region
        %s338 = ssub.s32 %s16, 2
        // Predicated region
        $region61: #{tpu_custom_call.1} parent=59 // pred_check
          %p339 = pneg %p148
        $region62: #{tpu_custom_call.1} parent=59 // pred_check_branch
          %341 = sbr.rel (%p339) target = $region64
        $region63: #{tpu_custom_call.1} parent=59 // pred_region
          %s342 = sand.u32 %s133, 1
          %s343 = scalar_lea.sflag [#allocation4], %s342
          %s344 = sand.u32 %s133, 1
          %s345 = smul.addr %s344, 8
          %s346 = scalar_lea.vmem [#allocation7], %s345
          %348 = dma.done %s343, 128
        $region64: #{tpu_custom_call.1} parent=59 // pred_fallthru
          _
      $region60: #{tpu_custom_call.1} parent=5 // pred_fallthru
        _
    $region6: #{tpu_custom_call.1} parent=1 // loop_footer
      %s20 = sadd.s32 1, %s16
    $region7: #{tpu_custom_call.1} parent=1 // loop_footer_branch
      %15 = sbr.rel target = $region3
    $region8: #{tpu_custom_call.1} parent=1 // loop_exit
      _
    %349 = vsyncpa [#allocation3], 1
    %s350 = scalar_lea.sflag [#allocation3], 1
    %351 = vsyncpa %s350, 1
    %352 = vsyncpa [#allocation6], 1
    %353 = vsyncpa [#allocation4], 1
    %s354 = scalar_lea.sflag [#allocation4], 1
    %355 = vsyncpa %s354, 1

</llo_original>
